<compile_context>
chip_gen: v7x
topology: tpu7x:2x2x1
jax: 0.10.0
libtpu: 0.0.40
codegen_flags: <defaults>
</compile_context>

<pallas_src>
import math
from functools import partial

import jax
import jax.numpy as jnp
from jax import lax
from jax.experimental import pallas as pl
from jax.experimental.pallas import tpu as pltpu

_INV_SQRT2 = 1.0 / math.sqrt(2.0)


def _gelu_exact(h):
    # Exact gelu in f32: h * 0.5 * (1 + erf(h / sqrt(2)))
    return h * 0.5 * (1.0 + lax.erf(h * _INV_SQRT2))


def _ffn_kernel(x_ref, w1t_ref, w2t_ref, o_ref, acc_ref, *, n_chunks, cf):
    # x_ref:   (tm, d_model)        current row tile
    # w1t_ref: (d_model, tf)        d_ff chunk of W1.T
    # w2t_ref: (tf, d_model)        d_ff chunk of W2.T
    # o_ref:   (tm, d_model)        output tile (constant across f axis)
    # acc_ref: (tm, d_model) f32    accumulator scratch
    f = pl.program_id(1)

    @pl.when(f == 0)
    def _():
        acc_ref[...] = jnp.zeros_like(acc_ref)

    if n_chunks == 1:
        h = jnp.dot(x_ref[...], w1t_ref[...],
                    preferred_element_type=jnp.float32)
        h = _gelu_exact(h)
        acc_ref[...] += jnp.dot(h.astype(w2t_ref.dtype), w2t_ref[...],
                                preferred_element_type=jnp.float32)
    else:
        # Inner unrolled loop over cf-wide d_ff sub-chunks: bounds the f32
        # GELU temporary while the scheduler overlaps VPU gelu with the next
        # MXU chunk.
        def body(c, acc):
            off = c * cf
            if not isinstance(off, int):
                off = pl.multiple_of(off, 128)
            h = jnp.dot(x_ref[...], w1t_ref[:, pl.ds(off, cf)],
                        preferred_element_type=jnp.float32)
            h = _gelu_exact(h)
            return acc + jnp.dot(h.astype(w2t_ref.dtype),
                                 w2t_ref[pl.ds(off, cf), :],
                                 preferred_element_type=jnp.float32)

        acc_ref[...] = lax.fori_loop(0, n_chunks, body, acc_ref[...],
                                     unroll=True)

    @pl.when(f == pl.num_programs(1) - 1)
    def _():
        o_ref[...] = acc_ref[...].astype(o_ref.dtype)


def _round_up(a, b):
    return (a + b - 1) // b * b


def _vmem_capacity_bytes():
    try:
        info = pltpu.get_tpu_info()
        cap = getattr(info, "vmem_capacity_bytes", None)
        if cap:
            return int(cap)
    except Exception:
        pass
    return 64 << 20  # conservative (v7x-sized) fallback


def _aligned_divisors(n, align=128):
    # Divisors of n that are multiples of `align`, descending.
    q = n // align
    return [align * d for d in range(q, 0, -1) if q % d == 0]


def _pick_cf(tf, tm, max_elems=512 * 1024):
    # Largest 128-multiple divisor of tf with tm*cf <= max_elems (bounds the
    # f32 gelu slab); 128 always divides tf.
    cap = max(128, (max_elems // max(tm, 1)) // 128 * 128)
    for cf in _aligned_divisors(tf):
        if cf <= cap:
            return cf
    return 128


def _est_vmem(tm, tf, cf, d_model, xb, wb, ob):
    # Double-buffered x/W1t/W2t/out blocks + f32 accumulator + gelu temps.
    return (2 * tm * d_model * xb
            + 2 * 2 * d_model * tf * wb
            + 2 * tm * d_model * ob
            + tm * d_model * 4
            + tm * cf * (8 + wb))


def _select_config(m, d_model, d_ff_pad, x_dtype, w_dtype, out_dtype,
                   tile_m, tile_f, chunk_f, vmem_limit_bytes):
    xb = jnp.dtype(x_dtype).itemsize
    wb = jnp.dtype(w_dtype).itemsize
    ob = jnp.dtype(out_dtype).itemsize
    sub = 16 if xb < 4 else 8

    vmem_cap = _vmem_capacity_bytes()
    if vmem_limit_bytes is None:
        # ~100 MiB on the 128 MiB parts (v5e/v6e), ~56 MiB on v7x.
        vmem_limit_bytes = max(32 << 20, min(vmem_cap - (8 << 20), 100 << 20))
    budget = int(vmem_limit_bytes * 0.9)

    if tile_m is None:
        # Chip-aware row tile: above the weight-streaming roofline.
        tile_m = 768 if vmem_cap >= (96 << 20) else 512
    tile_m = max(sub, tile_m // sub * sub)

    # Balance row tiles against M so the last tile is not mostly padding.
    n_rt = max(1, pl.cdiv(m, tile_m))
    tm = _round_up(pl.cdiv(m, n_rt), sub)

    if tile_f is not None:
        assert tile_f % 128 == 0 and d_ff_pad % tile_f == 0
        tf_cands = [tile_f]
    else:
        tf_cands = _aligned_divisors(d_ff_pad)

    picked = None
    while True:
        for tf in tf_cands:
            cf = chunk_f if chunk_f is not None else _pick_cf(tf, tm)
            if _est_vmem(tm, tf, cf, d_model, xb, wb, ob) <= budget:
                picked = (tf, cf)
                break
        if picked is not None or tm <= sub:
            break
        tm = max(sub, (tm // 2) // sub * sub)   # shrink rows, retry
    if picked is None:
        tf = tf_cands[-1]
        picked = (tf, chunk_f if chunk_f is not None else 128)
    tf, cf = picked
    assert cf % 128 == 0 and tf % cf == 0

    n_rt = pl.cdiv(m, tm)
    resident = (tf == d_ff_pad)
    # Megacore: weights-resident path keeps W1/W2 in VMEM across row tiles,
    # so splitting a single row tile in two is ~free and lets both v7x
    # TensorCores work on the "parallel" row axis.
    if resident and n_rt == 1 and m >= 2 * sub:
        n_rt = 2
        tm = _round_up(pl.cdiv(m, 2), sub)
    m_pad = n_rt * tm

    return (tm, n_rt, m_pad, tf, cf, tf // cf, d_ff_pad // tf, resident,
            int(vmem_limit_bytes))


@partial(jax.jit,
         static_argnames=("tile_m", "tile_f", "chunk_f", "vmem_limit_bytes"))
def positionwise_ffn(x, w1t, w2t, *, tile_m=None, tile_f=None, chunk_f=None,
                     vmem_limit_bytes=None):
    """Positionwise FFN forward: gelu(x @ W1.T) @ W2.T.

    x:   (..., d_model)
    w1t: (d_model, d_ff)   == W1.T  (pre-transposed, hoisted out of hot path)
    w2t: (d_ff, d_model)   == W2.T

    Dropout from the reference module is a no-op in forward (p=0.0, never
    applied) and is intentionally omitted here.
    """
    orig_shape = x.shape
    d_model = orig_shape[-1]
    d_ff = w1t.shape[1]
    assert w1t.shape == (d_model, d_ff)
    assert w2t.shape == (d_ff, d_model)

    x2d = x.reshape(-1, d_model)
    m = x2d.shape[0]

    # Pad d_ff to a lane multiple (zero columns of W1.T / zero rows of W2.T
    # are exact: gelu(0) == 0 and they contribute nothing to the output).
    d_ff_pad = _round_up(d_ff, 128)
    if d_ff_pad != d_ff:
        w1t = jnp.pad(w1t, ((0, 0), (0, d_ff_pad - d_ff)))
        w2t = jnp.pad(w2t, ((0, d_ff_pad - d_ff), (0, 0)))

    (tm, n_rt, m_pad, tf, cf, n_chunks, n_f, resident, vmem_limit) = \
        _select_config(m, d_model, d_ff_pad, x2d.dtype, w1t.dtype, x.dtype,
                       tile_m, tile_f, chunk_f, vmem_limit_bytes)

    if m_pad != m:
        x2d = jnp.pad(x2d, ((0, m_pad - m), (0, 0)))

    xb = x2d.dtype.itemsize
    ob = jnp.dtype(x.dtype).itemsize
    wb = w1t.dtype.itemsize
    cost = pl.CostEstimate(
        flops=4 * m_pad * d_model * d_ff_pad,
        transcendentals=m_pad * d_ff_pad,
        bytes_accessed=(m_pad * d_model * (xb + ob)
                        + (1 if resident else n_rt)
                        * 2 * d_model * d_ff_pad * wb),
    )

    out2d = pl.pallas_call(
        partial(_ffn_kernel, n_chunks=n_chunks, cf=cf),
        out_shape=jax.ShapeDtypeStruct((m_pad, d_model), x.dtype),
        grid_spec=pltpu.PrefetchScalarGridSpec(
            num_scalar_prefetch=0,
            grid=(n_rt, n_f),
            in_specs=[
                pl.BlockSpec((tm, d_model), lambda i, f: (i, 0)),
                # When n_f == 1 these block indices are constant, so the
                # weights stay VMEM-resident across all row tiles.
                pl.BlockSpec((d_model, tf), lambda i, f: (0, f)),
                pl.BlockSpec((tf, d_model), lambda i, f: (f, 0)),
            ],
            out_specs=pl.BlockSpec((tm, d_model), lambda i, f: (i, 0)),
            scratch_shapes=[pltpu.VMEM((tm, d_model), jnp.float32)],
        ),
        compiler_params=pltpu.CompilerParams(
            dimension_semantics=("parallel", "arbitrary"),
            vmem_limit_bytes=vmem_limit,
        ),
        cost_estimate=cost,
    )(x2d, w1t, w2t)

    if m_pad != m:
        out2d = out2d[:m]
    return out2d.reshape(orig_shape)


def _reference(x, w1, w2):
    xf = x.astype(jnp.float32)
    h = xf @ w1.astype(jnp.float32).T
    h = h * 0.5 * (1.0 + lax.erf(h / jnp.sqrt(2.0)))
    return (h @ w2.astype(jnp.float32).T).astype(x.dtype)


if __name__ == "__main__":
    key = jax.random.PRNGKey(0)
    k1, k2, k3, k4 = jax.random.split(key, 4)

    # ---- Test 1: small f32, weights-resident path -------------------------
    batch, seq, d_model, d_ff = 2, 8, 128, 256
    x = jax.random.normal(k1, (batch, seq, d_model), dtype=jnp.float32)
    # nn.Linear(d_model, d_ff, bias=False).weight -> (d_ff, d_model)
    w1 = jax.random.normal(k2, (d_ff, d_model), jnp.float32) / math.sqrt(d_model)
    # nn.Linear(d_ff, d_model, bias=False).weight -> (d_model, d_ff)
    w2 = jax.random.normal(k3, (d_model, d_ff), jnp.float32) / math.sqrt(d_ff)
    w1t, w2t = jnp.transpose(w1), jnp.transpose(w2)   # hoisted out of hot path

    out = jax.block_until_ready(positionwise_ffn(x, w1t, w2t))
    ref = _reference(x, w1, w2)
    assert out.shape == x.shape
    assert jnp.allclose(out, ref, atol=2e-4, rtol=2e-4)

    # ---- Test 2: ragged rows + streamed d_ff axis + inner chunk loop ------
    d_ff2 = 1024
    x2 = jax.random.normal(k4, (1, 20, d_model), dtype=jnp.float32)
    w1b = jax.random.normal(k2, (d_ff2, d_model), jnp.float32) / math.sqrt(d_model)
    w2b = jax.random.normal(k3, (d_model, d_ff2), jnp.float32) / math.sqrt(d_ff2)
    out2 = jax.block_until_ready(
        positionwise_ffn(x2, jnp.transpose(w1b), jnp.transpose(w2b),
                         tile_m=8, tile_f=512, chunk_f=128))
    ref2 = _reference(x2, w1b, w2b)
    assert jnp.allclose(out2, ref2, atol=2e-4, rtol=2e-4)

    # ---- Test 3: bf16 production dtype (f32 MXU accumulation) -------------
    xb16 = x.astype(jnp.bfloat16)
    out3 = jax.block_until_ready(
        positionwise_ffn(xb16, w1t.astype(jnp.bfloat16),
                         w2t.astype(jnp.bfloat16)))
    assert jnp.allclose(out3.astype(jnp.float32), _reference(x, w1, w2),
                        atol=6e-2, rtol=6e-2)

    # TODO(synk): nn.Dropout is defined in the module but never applied in
    # forward (and p=0.0), so it is intentionally omitted; the 'silu'
    # activation variant is not exercised by the reference default ('gelu').

    print("KERNEL_OK")
</pallas_src>

<mosaic_0001>
module attributes {stable_mosaic.version = 11 : i64} {
  func.func @_ffn_kernel(%arg0: i32, %arg1: i32, %arg2: memref<8x128xf32, #tpu.memory_space<vmem>>, %arg3: memref<128x256xf32, #tpu.memory_space<vmem>>, %arg4: memref<256x128xf32, #tpu.memory_space<vmem>>, %arg5: memref<8x128xf32, #tpu.memory_space<vmem>>, %arg6: memref<8x128xf32, #tpu.memory_space<vmem>>) attributes {dimension_semantics = [#tpu.dimension_semantics<parallel>, #tpu.dimension_semantics<arbitrary>], iteration_bounds = array<i64: 2, 1>, scalar_prefetch = 0 : i64, scratch_operands = 1 : i64, tpu.core_type = #tpu.core_type<tc>, window_params = [{transform_indices = @transform_0, window_bounds = array<i64: 8, 128>}, {transform_indices = @transform_1, window_bounds = array<i64: 128, 256>}, {transform_indices = @transform_2, window_bounds = array<i64: 256, 128>}, {transform_indices = @transform_3, window_bounds = array<i64: 8, 128>}]} {
    %c0_i32 = arith.constant 0 : i32
    %0 = arith.cmpi eq, %arg1, %c0_i32 : i32
    %1 = arith.extui %0 : i1 to i32
    %c0_i32_0 = arith.constant 0 : i32
    %2 = arith.cmpi ne, %1, %c0_i32_0 : i32
    scf.if %2 {
      %cst_16 = arith.constant 0.000000e+00 : f32
      %22 = vector.broadcast %cst_16 : f32 to vector<8x128xf32>
      %c0_17 = arith.constant 0 : index
      %c0_18 = arith.constant 0 : index
      %23 = vector.load %arg6[%c0_17, %c0_18] : memref<8x128xf32, #tpu.memory_space<vmem>>, vector<8x128xf32>
      tpu.vector_store %arg6[%c0_17, %c0_18], %22 {strides = array<i32>} : memref<8x128xf32, #tpu.memory_space<vmem>>, vector<8x128xf32>,
    } else {
    }
    %c0 = arith.constant 0 : index
    %c0_1 = arith.constant 0 : index
    %3 = vector.load %arg2[%c0, %c0_1] : memref<8x128xf32, #tpu.memory_space<vmem>>, vector<8x128xf32>
    %c0_2 = arith.constant 0 : index
    %c0_3 = arith.constant 0 : index
    %4 = vector.load %arg3[%c0_2, %c0_3] : memref<128x256xf32, #tpu.memory_space<vmem>>, vector<128x256xf32>
    %cst = arith.constant dense<0.000000e+00> : vector<8x256xf32>
    %5 = tpu.matmul %3, %4, %cst {dimension_numbers = #tpu.dot_dimension_numbers<[1], [0], [0], [1], [0, 0, 1, 1], [], []>} : vector<8x128xf32>, vector<128x256xf32>, vector<8x256xf32> -> vector<8x256xf32>
    %cst_4 = arith.constant 5.000000e-01 : f32
    %6 = vector.broadcast %cst_4 : f32 to vector<8x256xf32>
    %7 = arith.mulf %5, %6 : vector<8x256xf32>
    %cst_5 = arith.constant 0.707106769 : f32
    %8 = vector.broadcast %cst_5 : f32 to vector<8x256xf32>
    %9 = arith.mulf %5, %8 : vector<8x256xf32>
    %10 = math.erf %9 : vector<8x256xf32>
    %cst_6 = arith.constant 1.000000e+00 : f32
    %11 = vector.broadcast %cst_6 : f32 to vector<8x256xf32>
    %12 = arith.addf %11, %10 : vector<8x256xf32>
    %13 = arith.mulf %7, %12 : vector<8x256xf32>
    %c0_7 = arith.constant 0 : index
    %c0_8 = arith.constant 0 : index
    %14 = vector.load %arg6[%c0_7, %c0_8] : memref<8x128xf32, #tpu.memory_space<vmem>>, vector<8x128xf32>
    %c0_9 = arith.constant 0 : index
    %c0_10 = arith.constant 0 : index
    %15 = vector.load %arg4[%c0_9, %c0_10] : memref<256x128xf32, #tpu.memory_space<vmem>>, vector<256x128xf32>
    %cst_11 = arith.constant dense<0.000000e+00> : vector<8x128xf32>
    %16 = tpu.matmul %13, %15, %cst_11 {dimension_numbers = #tpu.dot_dimension_numbers<[1], [0], [0], [1], [0, 0, 1, 1], [], []>} : vector<8x256xf32>, vector<256x128xf32>, vector<8x128xf32> -> vector<8x128xf32>
    %17 = arith.addf %14, %16 : vector<8x128xf32>
    %c0_12 = arith.constant 0 : index
    %c0_13 = arith.constant 0 : index
    %18 = vector.load %arg6[%c0_12, %c0_13] : memref<8x128xf32, #tpu.memory_space<vmem>>, vector<8x128xf32>
    tpu.vector_store %arg6[%c0_12, %c0_13], %17 {strides = array<i32>} : memref<8x128xf32, #tpu.memory_space<vmem>>, vector<8x128xf32>,
    %c0_i32_14 = arith.constant 0 : i32
    %19 = arith.cmpi eq, %arg1, %c0_i32_14 : i32
    %20 = arith.extui %19 : i1 to i32
    %c0_i32_15 = arith.constant 0 : i32
    %21 = arith.cmpi ne, %20, %c0_i32_15 : i32
    scf.if %21 {
      %c0_16 = arith.constant 0 : index
      %c0_17 = arith.constant 0 : index
      %22 = vector.load %arg6[%c0_16, %c0_17] : memref<8x128xf32, #tpu.memory_space<vmem>>, vector<8x128xf32>
      %c0_18 = arith.constant 0 : index
      %c0_19 = arith.constant 0 : index
      %23 = vector.load %arg5[%c0_18, %c0_19] : memref<8x128xf32, #tpu.memory_space<vmem>>, vector<8x128xf32>
      tpu.vector_store %arg5[%c0_18, %c0_19], %22 {strides = array<i32>} : memref<8x128xf32, #tpu.memory_space<vmem>>, vector<8x128xf32>,
    } else {
    }
    return
  }
  func.func @transform_0(%arg0: i32, %arg1: i32) -> (i32, i32) {
    %c0_i32 = arith.constant 0 : i32
    %c0_i32_0 = arith.constant 0 : i32
    return %arg0, %c0_i32 : i32, i32
  }
  func.func @transform_1(%arg0: i32, %arg1: i32) -> (i32, i32) {
    %c0_i32 = arith.constant 0 : i32
    %c0_i32_0 = arith.constant 0 : i32
    return %c0_i32, %arg1 : i32, i32
  }
  func.func @transform_2(%arg0: i32, %arg1: i32) -> (i32, i32) {
    %c0_i32 = arith.constant 0 : i32
    %c0_i32_0 = arith.constant 0 : i32
    return %arg1, %c0_i32 : i32, i32
  }
  func.func @transform_3(%arg0: i32, %arg1: i32) -> (i32, i32) {
    %c0_i32 = arith.constant 0 : i32
    %c0_i32_0 = arith.constant 0 : i32
    return %arg0, %c0_i32 : i32, i32
  }
}

</mosaic_0001>

<llo_original>
// kernel: positionwise_ffn.1
$region0: #{positionwise_ffn.1}
  #allocation0 [shape = 'u32[]', space=smem, size = 0x4, offset = 0x4, fixed_abs, tag = 'smem constant byte address 0x4 - core index']
  #allocation1 [shape = 'u32[144,128]{1,0:T(1,128)}', space=vmem, size = 0x12000, scoped, tag = 'internal scratch']
  #allocation2 [shape = 'f32[8,128]{1,0:T(8,128)}', space=vmem, size = 0x1000, scoped, tag = 'scratch operand']
  %s0 = inlined_call_operand.hbm [shape: f32[16,128], index: 0, kind: input, shape index: {}]
  %s1 = inlined_call_operand.hbm [shape: f32[128,256], index: 1, kind: input, shape index: {}]
  %s2 = inlined_call_operand.hbm [shape: f32[256,128], index: 2, kind: input, shape index: {}]
  %s3 = inlined_call_operand.hbm [shape: f32[16,128], index: 3, kind: output, shape index: {}]
  %s4 = sld [smem:[#allocation0]]
  $region65: #{positionwise_ffn.1} parent=0
    _
  %s6 = ssub.s32 1, %s4
  %s7 = scalar_select 0, %s6, %s4
  $region1: #{positionwise_ffn.1} parent=0
    #allocation3 [shape = 'u8[8192]{0}', space=vmem, size = 0x2000, scoped, tag = 'input window, operand 0']
    #allocation4 [shape = 's32[2]{0}', space=sflag, size = 0x8, scoped, tag = 'scoped memory for positionwise_ffn.1']
    #allocation5 [shape = 's32[2]{0}', space=sflag, size = 0x8, scoped, tag = 'scoped memory for positionwise_ffn.1']
    #allocation6 [shape = 'u8[131072]{0}', space=vmem, size = 0x20000, scoped, tag = 'input window, operand 1, single buffered']
    #allocation7 [shape = 's32[1]{0}', space=sflag, size = 0x4, scoped, tag = 'scoped memory for positionwise_ffn.1']
    #allocation8 [shape = 'u8[131072]{0}', space=vmem, size = 0x20000, scoped, tag = 'input window, operand 2, single buffered']
    #allocation9 [shape = 'u8[8192]{0}', space=vmem, size = 0x2000, scoped, tag = 'output window, operand 0']
    %8 = vsyncpa [#allocation4], 0
    %s9 = scalar_lea.sflag [#allocation4], 1
    %10 = vsyncpa %s9, 0
    %11 = vsyncpa [#allocation7], 0
    %12 = vsyncpa [#allocation5], 0
    %s13 = scalar_lea.sflag [#allocation5], 1
    %14 = vsyncpa %s13, 0
    loop: start=0, step=1, limit=4
    $region2: #{positionwise_ffn.1} parent=1 // loop_pre_header
      _
    $region3: #{positionwise_ffn.1} parent=1 // loop_header
      %s16 = sphi 0, %s20
      %p17 = scmp.ge.s32.totalorder %s16, 4
      %s23 = sphi 0, %s35
      %s24 = sphi 0, %s31
      %s25 = sphi 0, %s23
      %s26 = sphi 0, %s24
      %s27 = sphi 0, %s25
      %s28 = sphi 0, %s26
      %s38 = sphi 0, %s40
      %s41 = sphi 0, %s38
      %s42 = sphi 0, %s41
      %s58 = sphi 0, %s42
      %s64 = sphi 0, %s66
      %s67 = sphi 0, %s64
      %s68 = sphi 0, %s67
      %s84 = sphi 0, %s68
      %s90 = sphi 0, %s92
      %s93 = sphi 0, %s90
      %s94 = sphi 0, %s93
      %s110 = sphi 0, %s94
      %s116 = sphi 0, %s118
      %s119 = sphi 0, %s116
      %s120 = sphi 0, %s119
      %s136 = sphi 0, %s120
    $region4: #{positionwise_ffn.1} parent=1 // loop_header_branch
      %19 = sbr.rel (%p17) target = $region8
    $region5: #{positionwise_ffn.1} parent=1 // loop_body
      %s21 = ssub.s32 %s16, 1
      %s22 = ssub.s32 %s16, 2
      %s29 = sadd.s32 1, %s24
      %p30 = scmp.ge.s32.totalorder %s29, 1
      %s31 = scalar_select %p30, 0, %s29
      %s32 = sadd.s32 1, %s23
      %s33 = scalar_select %p30, %s32, %s23
      %p34 = scmp.ge.s32.totalorder %s33, 2
      %s35 = scalar_select %p34, 0, %s33
      %s36 = ssub.s32 %s23, %s35
      %p37 = scmp.eq.s32.totalorder %s36, 0
      %s39 = sadd.s32 %s38, 1
      %s40 = scalar_select %p37, %s38, %s39
      %p43 = pneg %p37
      %p44 = scmp.eq.s32.totalorder %s16, 1
      %p45 = por %p43, %p44
      %p46 = scmp.ne.s32.totalorder %s38, %s41
      %p47 = scmp.eq.s32.totalorder %s16, 0
      %p48 = por %p46, %p47
      %p49 = scmp.ne.s32.totalorder %s38, %s41
      %p50 = scmp.eq.s32.totalorder %s21, 1
      %p51 = por %p49, %p50
      %p52 = scmp.ne.s32.totalorder %s41, %s42
      %p53 = scmp.eq.s32.totalorder %s21, 0
      %p54 = por %p52, %p53
      %p55 = scmp.ne.s32.totalorder %s41, %s42
      %p56 = scmp.eq.s32.totalorder %s22, 1
      %p57 = por %p55, %p56
      %p59 = scmp.ne.s32.totalorder %s42, %s58
      %p60 = scmp.eq.s32.totalorder %s22, 0
      %p61 = por %p59, %p60
      %s62 = ssub.s32 %s24, %s31
      %p63 = scmp.eq.s32.totalorder %s62, 0
      %s65 = sadd.s32 %s64, 1
      %s66 = scalar_select %p63, %s64, %s65
      %p69 = pneg %p63
      %p70 = scmp.eq.s32.totalorder %s16, 1
      %p71 = por %p69, %p70
      %p72 = scmp.ne.s32.totalorder %s64, %s67
      %p73 = scmp.eq.s32.totalorder %s16, 0
      %p74 = por %p72, %p73
      %p75 = scmp.ne.s32.totalorder %s64, %s67
      %p76 = scmp.eq.s32.totalorder %s21, 1
      %p77 = por %p75, %p76
      %p78 = scmp.ne.s32.totalorder %s67, %s68
      %p79 = scmp.eq.s32.totalorder %s21, 0
      %p80 = por %p78, %p79
      %p81 = scmp.ne.s32.totalorder %s67, %s68
      %p82 = scmp.eq.s32.totalorder %s22, 1
      %p83 = por %p81, %p82
      %p85 = scmp.ne.s32.totalorder %s68, %s84
      %p86 = scmp.eq.s32.totalorder %s22, 0
      %p87 = por %p85, %p86
      %s88 = ssub.s32 %s24, %s31
      %p89 = scmp.eq.s32.totalorder %s88, 0
      %s91 = sadd.s32 %s90, 1
      %s92 = scalar_select %p89, %s90, %s91
      %p95 = pneg %p89
      %p96 = scmp.eq.s32.totalorder %s16, 1
      %p97 = por %p95, %p96
      %p98 = scmp.ne.s32.totalorder %s90, %s93
      %p99 = scmp.eq.s32.totalorder %s16, 0
      %p100 = por %p98, %p99
      %p101 = scmp.ne.s32.totalorder %s90, %s93
      %p102 = scmp.eq.s32.totalorder %s21, 1
      %p103 = por %p101, %p102
      %p104 = scmp.ne.s32.totalorder %s93, %s94
      %p105 = scmp.eq.s32.totalorder %s21, 0
      %p106 = por %p104, %p105
      %p107 = scmp.ne.s32.totalorder %s93, %s94
      %p108 = scmp.eq.s32.totalorder %s22, 1
      %p109 = por %p107, %p108
      %p111 = scmp.ne.s32.totalorder %s94, %s110
      %p112 = scmp.eq.s32.totalorder %s22, 0
      %p113 = por %p111, %p112
      %s114 = ssub.s32 %s23, %s35
      %p115 = scmp.eq.s32.totalorder %s114, 0
      %s117 = sadd.s32 %s116, 1
      %s118 = scalar_select %p115, %s116, %s117
      %p121 = pneg %p115
      %p122 = scmp.eq.s32.totalorder %s16, 1
      %p123 = por %p121, %p122
      %p124 = scmp.ne.s32.totalorder %s116, %s119
      %p125 = scmp.eq.s32.totalorder %s16, 0
      %p126 = por %p124, %p125
      %p127 = scmp.ne.s32.totalorder %s116, %s119
      %p128 = scmp.eq.s32.totalorder %s21, 1
      %p129 = por %p127, %p128
      %p130 = scmp.ne.s32.totalorder %s119, %s120
      %p131 = scmp.eq.s32.totalorder %s21, 0
      %p132 = por %p130, %p131
      %p133 = scmp.ne.s32.totalorder %s119, %s120
      %p134 = scmp.eq.s32.totalorder %s22, 1
      %p135 = por %p133, %p134
      %p137 = scmp.ne.s32.totalorder %s120, %s136
      %p138 = scmp.eq.s32.totalorder %s22, 0
      %p139 = por %p137, %p138
      %p140 = scmp.le.s32.totalorder 1, %s16
      %p141 = scmp.lt.s32.totalorder %s16, 3
      %p142 = pnand %p140, %p141
      %p143 = pneg %p142
      // Predicated region
      $region9: #{positionwise_ffn.1} parent=5 // pred_check
        _
      $region10: #{positionwise_ffn.1} parent=5 // pred_check_branch
        %145 = sbr.rel (%p142) target = $region12
      $region11: #{positionwise_ffn.1} parent=5 // pred_region
        %s146 = ssub.s32 %s16, 1
        // Predicated region
        $region13: #{positionwise_ffn.1} parent=11 // pred_check
          %p147 = pneg %p80
        $region14: #{positionwise_ffn.1} parent=11 // pred_check_branch
          %149 = sbr.rel (%p147) target = $region16
        $region15: #{positionwise_ffn.1} parent=11 // pred_region
          %s150 = smul.u32 2, %s26
          %s152 = ssub.s32 4096, 4096
          %153 = vsyncadd [#allocation7], %s152
          %s154 = smul.addr %s150, 128
          %s155 = scalar_lea.hbm %s1, %s154
          %s156 = sshll.u32 [#allocation6], 4
          %s157 = int_to_ptr.vmem [resolvable:$true] %s156
          %162 = dma.hbm_to_vmem [thread:$0]  %s155, 4096, %s157, [#allocation7], 256, 256, 16
        $region16: #{positionwise_ffn.1} parent=11 // pred_fallthru
          _
        // Predicated region
        $region17: #{positionwise_ffn.1} parent=11 // pred_check
          %p163 = pneg %p106
        $region18: #{positionwise_ffn.1} parent=11 // pred_check_branch
          %165 = sbr.rel (%p163) target = $region20
        $region19: #{positionwise_ffn.1} parent=11 // pred_region
          %s166 = smul.u32 32, %s26
          %s168 = ssub.s32 4096, 4096
          %169 = vsyncadd [#allocation7], %s168
          %s170 = smul.addr %s166, 128
          %s171 = scalar_lea.hbm %s2, %s170
          %s172 = sshll.u32 [#allocation8], 4
          %s173 = int_to_ptr.vmem [resolvable:$true] %s172
          %178 = dma.hbm_to_vmem [thread:$0]  %s171, 4096, %s173, [#allocation7], 128, 128, 8
        $region20: #{positionwise_ffn.1} parent=11 // pred_fallthru
          _
      $region12: #{positionwise_ffn.1} parent=5 // pred_fallthru
        _
      %p179 = scmp.lt.s32.totalorder %s16, 2
      // Predicated region
      $region21: #{positionwise_ffn.1} parent=5 // pred_check
        %p180 = pneg %p179
      $region22: #{positionwise_ffn.1} parent=5 // pred_check_branch
        %182 = sbr.rel (%p180) target = $region24
      $region23: #{positionwise_ffn.1} parent=5 // pred_region
        // Predicated region
        $region25: #{positionwise_ffn.1} parent=23 // pred_check
          %p183 = pneg %p48
        $region26: #{positionwise_ffn.1} parent=23 // pred_check_branch
          %185 = sbr.rel (%p183) target = $region28
        $region27: #{positionwise_ffn.1} parent=23 // pred_region
          %s186 = sand.u32 %s38, 1
          %s187 = scalar_lea.sflag [#allocation4], %s186
          %s188 = sand.u32 %s38, 1
          %s189 = smul.addr %s188, 8
          %s190 = scalar_lea.vmem [#allocation3], %s189
          %s192 = ssub.s32 128, 128
          %193 = vsyncadd %s187, %s192
          %s194 = smul.addr %s23, 128
          %s195 = scalar_lea.hbm %s0, %s194
          %s197 = sshll.u32 %s190, 4
          %s198 = int_to_ptr.vmem [resolvable:$true] %s197
          %200 = dma.hbm_to_vmem [thread:$0]  %s195, 128, %s198, %s187
        $region28: #{positionwise_ffn.1} parent=23 // pred_fallthru
          _
      $region24: #{positionwise_ffn.1} parent=5 // pred_fallthru
        _
      %p201 = scmp.le.s32.totalorder 1, %s16
      %p202 = scmp.lt.s32.totalorder %s16, 3
      %p203 = pnand %p201, %p202
      %p204 = pneg %p203
      // Predicated region
      $region29: #{positionwise_ffn.1} parent=5 // pred_check
        _
      $region30: #{positionwise_ffn.1} parent=5 // pred_check_branch
        %206 = sbr.rel (%p203) target = $region32
      $region31: #{positionwise_ffn.1} parent=5 // pred_region
        %s207 = ssub.s32 %s16, 1
        %s208 = sand.u32 %s41, 1
        %s209 = scalar_lea.sflag [#allocation4], %s208
        %s210 = sand.u32 %s41, 1
        %s211 = smul.addr %s210, 8
        %s212 = scalar_lea.vmem [#allocation3], %s211
        // Predicated region
        $region33: #{positionwise_ffn.1} parent=31 // pred_check
          %p213 = pneg %p54
        $region34: #{positionwise_ffn.1} parent=31 // pred_check_branch
          %215 = sbr.rel (%p213) target = $region36
        $region35: #{positionwise_ffn.1} parent=31 // pred_region
          %216 = dma.done %s209, 128
        $region36: #{positionwise_ffn.1} parent=31 // pred_fallthru
          _
        // Predicated region
        $region37: #{positionwise_ffn.1} parent=31 // pred_check
          %p217 = pneg %p80
        $region38: #{positionwise_ffn.1} parent=31 // pred_check_branch
          %219 = sbr.rel (%p217) target = $region40
        $region39: #{positionwise_ffn.1} parent=31 // pred_region
          %220 = dma.done [#allocation7], 4096
        $region40: #{positionwise_ffn.1} parent=31 // pred_fallthru
          _
        // Predicated region
        $region41: #{positionwise_ffn.1} parent=31 // pred_check
          %p221 = pneg %p106
        $region42: #{positionwise_ffn.1} parent=31 // pred_check_branch
          %223 = sbr.rel (%p221) target = $region44
        $region43: #{positionwise_ffn.1} parent=31 // pred_region
          %224 = dma.done [#allocation7], 4096
        $region44: #{positionwise_ffn.1} parent=31 // pred_fallthru
          _
        %s225 = sand.u32 %s41, 1
        %s226 = scalar_lea.sflag [#allocation4], %s225
        %s227 = sand.u32 %s41, 1
        %s228 = smul.addr %s227, 8
        %s229 = scalar_lea.vmem [#allocation3], %s228
        %p230 = pneg %p54
        %p231 = pneg %p51
        %p232 = pneg %p80
        %p233 = pneg %p77
        %p234 = pneg %p106
        %p235 = pneg %p103
        %p236 = pneg %p132
        %p237 = pneg %p129
        %s238 = sand.u32 %s119, 1
        %s239 = scalar_lea.sflag [#allocation5], %s238
        %s240 = sand.u32 %s119, 1
        %s241 = smul.addr %s240, 8
        %s242 = scalar_lea.vmem [#allocation9], %s241
        %s243 = smul.u32 2, %s26
        %s244 = smul.u32 32, %s26
        %p245 = scmp.eq.s32.totalorder %s26, 0
        // Predicated region
        $region45: #{positionwise_ffn.1} parent=31 // pred_check
          %p246 = pneg %p245
        $region46: #{positionwise_ffn.1} parent=31 // pred_check_branch
          %248 = sbr.rel (%p246) target = $region48
        $region47: #{positionwise_ffn.1} parent=31 // pred_region
          %249 = vst [vmem:[#allocation2] sm:$0xff] 0.0
        $region48: #{positionwise_ffn.1} parent=31 // pred_fallthru
          _
        %v250 = vld [vmem:[%s212] sm:$0xff]
        %v251 = vld [vmem:[#allocation6] sm:$0xff]
        %v252 = vld [vmem:[#allocation6 + $0x8] sm:$0xff]
        %v253 = vld [vmem:[#allocation6 + $0x10] sm:$0xff]
        %v254 = vld [vmem:[#allocation6 + $0x18] sm:$0xff]
        %v255 = vld [vmem:[#allocation6 + $0x20] sm:$0xff]
        %v256 = vld [vmem:[#allocation6 + $0x28] sm:$0xff]
        %v257 = vld [vmem:[#allocation6 + $0x30] sm:$0xff]
        %v258 = vld [vmem:[#allocation6 + $0x38] sm:$0xff]
        %v259 = vld [vmem:[#allocation6 + $0x40] sm:$0xff]
        %v260 = vld [vmem:[#allocation6 + $0x48] sm:$0xff]
        %v261 = vld [vmem:[#allocation6 + $0x50] sm:$0xff]
        %v262 = vld [vmem:[#allocation6 + $0x58] sm:$0xff]
        %v263 = vld [vmem:[#allocation6 + $0x60] sm:$0xff]
        %v264 = vld [vmem:[#allocation6 + $0x68] sm:$0xff]
        %v265 = vld [vmem:[#allocation6 + $0x70] sm:$0xff]
        %v266 = vld [vmem:[#allocation6 + $0x78] sm:$0xff]
        %v267 = vld [vmem:[#allocation6 + $0x80] sm:$0xff]
        %v268 = vld [vmem:[#allocation6 + $0x88] sm:$0xff]
        %v269 = vld [vmem:[#allocation6 + $0x90] sm:$0xff]
        %v270 = vld [vmem:[#allocation6 + $0x98] sm:$0xff]
        %v271 = vld [vmem:[#allocation6 + $0xa0] sm:$0xff]
        %v272 = vld [vmem:[#allocation6 + $0xa8] sm:$0xff]
        %v273 = vld [vmem:[#allocation6 + $0xb0] sm:$0xff]
        %v274 = vld [vmem:[#allocation6 + $0xb8] sm:$0xff]
        %v275 = vld [vmem:[#allocation6 + $0xc0] sm:$0xff]
        %v276 = vld [vmem:[#allocation6 + $0xc8] sm:$0xff]
        %v277 = vld [vmem:[#allocation6 + $0xd0] sm:$0xff]
        %v278 = vld [vmem:[#allocation6 + $0xd8] sm:$0xff]
        %v279 = vld [vmem:[#allocation6 + $0xe0] sm:$0xff]
        %v280 = vld [vmem:[#allocation6 + $0xe8] sm:$0xff]
        %v281 = vld [vmem:[#allocation6 + $0xf0] sm:$0xff]
        %v282 = vld [vmem:[#allocation6 + $0xf8] sm:$0xff]
        %283 = vmatprep.subr.mxu0 %v252
        %284 = vmatpush1.msra.mxu0 %v251
        %285 = vmatprep.subr.mxu0 %v254
        %286 = vmatpush1.msra.mxu0 %v253
        %287 = vmatprep.subr.mxu0 %v256
        %288 = vmatpush1.msra.mxu0 %v255
        %289 = vmatprep.subr.mxu0 %v258
        %290 = vmatpush1.msra.mxu0 %v257
        %291 = vmatprep.subr.mxu0 %v260
        %292 = vmatpush1.msra.mxu0 %v259
        %293 = vmatprep.subr.mxu0 %v262
        %294 = vmatpush1.msra.mxu0 %v261
        %295 = vmatprep.subr.mxu0 %v264
        %296 = vmatpush1.msra.mxu0 %v263
        %297 = vmatprep.subr.mxu0 %v266
        %298 = vmatpush1.msra.mxu0 %v265
        %299 = vmatprep.subr.mxu0 %v268
        %300 = vmatpush1.msra.mxu0 %v267
        %301 = vmatprep.subr.mxu0 %v270
        %302 = vmatpush1.msra.mxu0 %v269
        %303 = vmatprep.subr.mxu0 %v272
        %304 = vmatpush1.msra.mxu0 %v271
        %305 = vmatprep.subr.mxu0 %v274
        %306 = vmatpush1.msra.mxu0 %v273
        %307 = vmatprep.subr.mxu0 %v276
        %308 = vmatpush1.msra.mxu0 %v275
        %309 = vmatprep.subr.mxu0 %v278
        %310 = vmatpush1.msra.mxu0 %v277
        %311 = vmatprep.subr.mxu0 %v280
        %312 = vmatpush1.msra.mxu0 %v279
        %313 = vmatprep.subr.mxu0 %v282
        %314 = vmatpush1.msra.mxu0 %v281
        %315 = vmatprep.subr.mxu0 0.0
        %316 = vmatpush1.msra.mxu0 0.0
        %317 = vmatprep.subr.mxu0 0.0
        %318 = vmatpush1.msra.mxu0 0.0
        %319 = vmatprep.subr.mxu0 0.0
        %320 = vmatpush1.msra.mxu0 0.0
        %321 = vmatprep.subr.mxu0 0.0
        %322 = vmatpush1.msra.mxu0 0.0
        %323 = vmatprep.subr.mxu0 0.0
        %324 = vmatpush1.msra.mxu0 0.0
        %325 = vmatprep.subr.mxu0 0.0
        %326 = vmatpush1.msra.mxu0 0.0
        %327 = vmatprep.subr.mxu0 0.0
        %328 = vmatpush1.msra.mxu0 0.0
        %329 = vmatprep.subr.mxu0 0.0
        %330 = vmatpush1.msra.mxu0 0.0
        %331 = vmatprep.subr.mxu0 0.0
        %332 = vmatpush1.msra.mxu0 0.0
        %333 = vmatprep.subr.mxu0 0.0
        %334 = vmatpush1.msra.mxu0 0.0
        %335 = vmatprep.subr.mxu0 0.0
        %336 = vmatpush1.msra.mxu0 0.0
        %337 = vmatprep.subr.mxu0 0.0
        %338 = vmatpush1.msra.mxu0 0.0
        %339 = vmatprep.subr.mxu0 0.0
        %340 = vmatpush1.msra.mxu0 0.0
        %341 = vmatprep.subr.mxu0 0.0
        %342 = vmatpush1.msra.mxu0 0.0
        %343 = vmatprep.subr.mxu0 0.0
        %344 = vmatpush1.msra.mxu0 0.0
        %345 = vmatprep.subr.mxu0 0.0
        %346 = vmatpush1.msra.mxu0 0.0
        %347 = vmatprep.mubr.f32.mxu0 0.0
        %348 = vmatmul.mubr.f32.gmra.mrb[0].mxu0 %v250
        %v349 = vpop.f32.mrb[0].mxu0
        %v350 = vadd.f32 0.0, %v349
        %v351 = vpop.f32.mrb[0].mxu0
        %v352 = vadd.f32 0.0, %v351
        %353 = vdwg.mxu0
        %v354 = vmul.f32 %v350, 0.5
        %v355 = vmul.f32 %v352, 0.5
        %v356 = vmul.f32 %v350, 0.70710677
        %v357 = vmul.f32 %v352, 0.70710677
        %v358 = verf.f32.pop %v356
        %v359 = verf.f32.pop %v357
        %v360 = vadd.f32 %v358, 1.0
        %v361 = vadd.f32 %v359, 1.0
        %v362 = vmul.f32 %v354, %v360
        %v363 = vmul.f32 %v355, %v361
        %v364 = vld [vmem:[#allocation2] sm:$0xff]
        %v365 = vld [vmem:[#allocation8] sm:$0xff]
        %v366 = vld [vmem:[#allocation8 + $0x8] sm:$0xff]
        %v367 = vld [vmem:[#allocation8 + $0x10] sm:$0xff]
        %v368 = vld [vmem:[#allocation8 + $0x18] sm:$0xff]
        %v369 = vld [vmem:[#allocation8 + $0x20] sm:$0xff]
        %v370 = vld [vmem:[#allocation8 + $0x28] sm:$0xff]
        %v371 = vld [vmem:[#allocation8 + $0x30] sm:$0xff]
        %v372 = vld [vmem:[#allocation8 + $0x38] sm:$0xff]
        %v373 = vld [vmem:[#allocation8 + $0x40] sm:$0xff]
        %v374 = vld [vmem:[#allocation8 + $0x48] sm:$0xff]
        %v375 = vld [vmem:[#allocation8 + $0x50] sm:$0xff]
        %v376 = vld [vmem:[#allocation8 + $0x58] sm:$0xff]
        %v377 = vld [vmem:[#allocation8 + $0x60] sm:$0xff]
        %v378 = vld [vmem:[#allocation8 + $0x68] sm:$0xff]
        %v379 = vld [vmem:[#allocation8 + $0x70] sm:$0xff]
        %v380 = vld [vmem:[#allocation8 + $0x78] sm:$0xff]
        %v381 = vld [vmem:[#allocation8 + $0x80] sm:$0xff]
        %v382 = vld [vmem:[#allocation8 + $0x88] sm:$0xff]
        %v383 = vld [vmem:[#allocation8 + $0x90] sm:$0xff]
        %v384 = vld [vmem:[#allocation8 + $0x98] sm:$0xff]
        %v385 = vld [vmem:[#allocation8 + $0xa0] sm:$0xff]
        %v386 = vld [vmem:[#allocation8 + $0xa8] sm:$0xff]
        %v387 = vld [vmem:[#allocation8 + $0xb0] sm:$0xff]
        %v388 = vld [vmem:[#allocation8 + $0xb8] sm:$0xff]
        %v389 = vld [vmem:[#allocation8 + $0xc0] sm:$0xff]
        %v390 = vld [vmem:[#allocation8 + $0xc8] sm:$0xff]
        %v391 = vld [vmem:[#allocation8 + $0xd0] sm:$0xff]
        %v392 = vld [vmem:[#allocation8 + $0xd8] sm:$0xff]
        %v393 = vld [vmem:[#allocation8 + $0xe0] sm:$0xff]
        %v394 = vld [vmem:[#allocation8 + $0xe8] sm:$0xff]
        %v395 = vld [vmem:[#allocation8 + $0xf0] sm:$0xff]
        %v396 = vld [vmem:[#allocation8 + $0xf8] sm:$0xff]
        %397 = vmatprep.subr.mxu0 0.0
        %398 = vmatpush1.msra.mxu0 %v365
        %399 = vmatprep.subr.mxu0 0.0
        %400 = vmatpush1.msra.mxu0 %v366
        %401 = vmatprep.subr.mxu0 0.0
        %402 = vmatpush1.msra.mxu0 %v367
        %403 = vmatprep.subr.mxu0 0.0
        %404 = vmatpush1.msra.mxu0 %v368
        %405 = vmatprep.subr.mxu0 0.0
        %406 = vmatpush1.msra.mxu0 %v369
        %407 = vmatprep.subr.mxu0 0.0
        %408 = vmatpush1.msra.mxu0 %v370
        %409 = vmatprep.subr.mxu0 0.0
        %410 = vmatpush1.msra.mxu0 %v371
        %411 = vmatprep.subr.mxu0 0.0
        %412 = vmatpush1.msra.mxu0 %v372
        %413 = vmatprep.subr.mxu0 0.0
        %414 = vmatpush1.msra.mxu0 %v373
        %415 = vmatprep.subr.mxu0 0.0
        %416 = vmatpush1.msra.mxu0 %v374
        %417 = vmatprep.subr.mxu0 0.0
        %418 = vmatpush1.msra.mxu0 %v375
        %419 = vmatprep.subr.mxu0 0.0
        %420 = vmatpush1.msra.mxu0 %v376
        %421 = vmatprep.subr.mxu0 0.0
        %422 = vmatpush1.msra.mxu0 %v377
        %423 = vmatprep.subr.mxu0 0.0
        %424 = vmatpush1.msra.mxu0 %v378
        %425 = vmatprep.subr.mxu0 0.0
        %426 = vmatpush1.msra.mxu0 %v379
        %427 = vmatprep.subr.mxu0 0.0
        %428 = vmatpush1.msra.mxu0 %v380
        %429 = vmatprep.subr.mxu0 0.0
        %430 = vmatpush1.msra.mxu0 %v381
        %431 = vmatprep.subr.mxu0 0.0
        %432 = vmatpush1.msra.mxu0 %v382
        %433 = vmatprep.subr.mxu0 0.0
        %434 = vmatpush1.msra.mxu0 %v383
        %435 = vmatprep.subr.mxu0 0.0
        %436 = vmatpush1.msra.mxu0 %v384
        %437 = vmatprep.subr.mxu0 0.0
        %438 = vmatpush1.msra.mxu0 %v385
        %439 = vmatprep.subr.mxu0 0.0
        %440 = vmatpush1.msra.mxu0 %v386
        %441 = vmatprep.subr.mxu0 0.0
        %442 = vmatpush1.msra.mxu0 %v387
        %443 = vmatprep.subr.mxu0 0.0
        %444 = vmatpush1.msra.mxu0 %v388
        %445 = vmatprep.subr.mxu0 0.0
        %446 = vmatpush1.msra.mxu0 %v389
        %447 = vmatprep.subr.mxu0 0.0
        %448 = vmatpush1.msra.mxu0 %v390
        %449 = vmatprep.subr.mxu0 0.0
        %450 = vmatpush1.msra.mxu0 %v391
        %451 = vmatprep.subr.mxu0 0.0
        %452 = vmatpush1.msra.mxu0 %v392
        %453 = vmatprep.subr.mxu0 0.0
        %454 = vmatpush1.msra.mxu0 %v393
        %455 = vmatprep.subr.mxu0 0.0
        %456 = vmatpush1.msra.mxu0 %v394
        %457 = vmatprep.subr.mxu0 0.0
        %458 = vmatpush1.msra.mxu0 %v395
        %459 = vmatprep.subr.mxu0 0.0
        %460 = vmatpush1.msra.mxu0 %v396
        %461 = vmatprep.mubr.f32.mxu0 %v363
        %462 = vmatmul.mubr.f32.gmra.mrb[0].mxu0 %v362
        %v463 = vpop.f32.mrb[0].mxu0
        %v464 = vadd.f32 0.0, %v463
        %v465 = vpop.f32.mrb[0].mxu0
        %466 = vdwg.mxu0
        %v467 = vadd.f32 %v364, %v464
        %468 = vst [vmem:[#allocation2] sm:$0xff] %v467
        // Predicated region
        $region49: #{positionwise_ffn.1} parent=31 // pred_check
          %p469 = pneg %p245
        $region50: #{positionwise_ffn.1} parent=31 // pred_check_branch
          %471 = sbr.rel (%p469) target = $region52
        $region51: #{positionwise_ffn.1} parent=31 // pred_region
          %v472 = vld [vmem:[#allocation2] sm:$0xff]
          %473 = vst [vmem:[%s242] sm:$0xff] %v472
        $region52: #{positionwise_ffn.1} parent=31 // pred_fallthru
          _
        %s474 = sand.u32 %s119, 1
        %s475 = scalar_lea.sflag [#allocation5], %s474
        %s476 = sand.u32 %s119, 1
        %s477 = smul.addr %s476, 8
        %s478 = scalar_lea.vmem [#allocation9], %s477
        // Predicated region
        $region53: #{positionwise_ffn.1} parent=31 // pred_check
          %p479 = pneg %p129
        $region54: #{positionwise_ffn.1} parent=31 // pred_check_branch
          %481 = sbr.rel (%p479) target = $region56
        $region55: #{positionwise_ffn.1} parent=31 // pred_region
          %s483 = ssub.s32 128, 128
          %484 = vsyncadd %s475, %s483
          %s485 = smul.addr %s25, 128
          %s486 = scalar_lea.hbm %s3, %s485
          %s488 = sshll.u32 %s478, 4
          %s489 = int_to_ptr.vmem [resolvable:$true] %s488
          %491 = dma.vmem_to_hbm [thread:$0]  %s489, 128, %s486, %s475
        $region56: #{positionwise_ffn.1} parent=31 // pred_fallthru
          _
      $region32: #{positionwise_ffn.1} parent=5 // pred_fallthru
        _
      %p492 = scmp.le.s32.totalorder 2, %s16
      // Predicated region
      $region57: #{positionwise_ffn.1} parent=5 // pred_check
        %p493 = pneg %p492
      $region58: #{positionwise_ffn.1} parent=5 // pred_check_branch
        %495 = sbr.rel (%p493) target = $region60
      $region59: #{positionwise_ffn.1} parent=5 // pred_region
        %s496 = ssub.s32 %s16, 2
        // Predicated region
        $region61: #{positionwise_ffn.1} parent=59 // pred_check
          %p497 = pneg %p135
        $region62: #{positionwise_ffn.1} parent=59 // pred_check_branch
          %499 = sbr.rel (%p497) target = $region64
        $region63: #{positionwise_ffn.1} parent=59 // pred_region
          %s500 = sand.u32 %s120, 1
          %s501 = scalar_lea.sflag [#allocation5], %s500
          %s502 = sand.u32 %s120, 1
          %s503 = smul.addr %s502, 8
          %s504 = scalar_lea.vmem [#allocation9], %s503
          %505 = dma.done %s501, 128
        $region64: #{positionwise_ffn.1} parent=59 // pred_fallthru
          _
      $region60: #{positionwise_ffn.1} parent=5 // pred_fallthru
        _
    $region6: #{positionwise_ffn.1} parent=1 // loop_footer
      %s20 = sadd.s32 1, %s16
    $region7: #{positionwise_ffn.1} parent=1 // loop_footer_branch
      %15 = sbr.rel target = $region3
    $region8: #{positionwise_ffn.1} parent=1 // loop_exit
      _
    %506 = vsyncpa [#allocation4], 1
    %s507 = scalar_lea.sflag [#allocation4], 1
    %508 = vsyncpa %s507, 1
    %509 = vsyncpa [#allocation7], 1
    %510 = vsyncpa [#allocation5], 1
    %s511 = scalar_lea.sflag [#allocation5], 1
    %512 = vsyncpa %s511, 1

</llo_original>
